<compile_context>
chip_gen: v6e
topology: v6e:2x2x1
jax: 0.10.0
libtpu: 0.0.40
codegen_flags: <defaults>
</compile_context>

<pallas_src>
import jax
import jax.numpy as jnp
from jax.experimental import pallas as pl
from jax.experimental.pallas import tpu as pltpu

EPS = 1e-6


def _sublayer_connection_kernel(x_ref, w_ref, b_ref, o_ref):
    """One (TM, D) row tile of  out = x + Linear(LayerNorm(x)).

    The LayerNorm affine (gamma/beta) is pre-folded into w_ref/b_ref by the
    wrapper, so the kernel only computes the raw normalisation xc * 1/(std+eps).
    """
    x = x_ref[...].astype(jnp.float32)
    d = x.shape[-1]

    # --- LayerNorm core (PyTorch semantics: unbiased std, divide by std+eps) ---
    mean = jnp.mean(x, axis=-1, keepdims=True)
    xc = x - mean
    denom = 1.0 / max(d - 1, 1)  # guard against degenerate D == 1
    std = jnp.sqrt(jnp.sum(xc * xc, axis=-1, keepdims=True) * denom)
    # (TM, 1) reciprocal then multiply instead of a dense (TM, D) divide.
    inv = pl.reciprocal(std + EPS, approx=False)
    normed = xc * inv

    # --- fused sublayer: normed @ (gamma*W) + (beta@W + b) on the MXU, f32 acc ---
    y = jnp.dot(normed.astype(w_ref.dtype), w_ref[...],
                preferred_element_type=jnp.float32)
    y = y + b_ref[...]

    # --- dropout (identity at eval) + residual ---
    # TODO(synk): train-mode dropout (RNG mask) not implemented; eval semantics only.
    o_ref[...] = (x + y).astype(o_ref.dtype)


def _choose_tm(m, d, itemsize, target_tile_bytes=2 << 20):
    """Row-tile size: ~target bytes per (TM, D) tile, >= 2 (even) grid steps."""
    if m <= 8:
        return m  # full array dim -> always a legal block shape
    # sublane multiple for the x/out dtype (8 for f32, 16 for bf16, 32 for 8-bit)
    sub = max(8, 32 // max(itemsize, 1))
    rows = max(sub, target_tile_bytes // max(d * itemsize, 1))
    rows = int(min(rows, m))
    grid = pl.cdiv(m, rows)
    grid = max(grid, 2)          # v7x: give both TensorCores work
    if grid % 2:
        grid += 1                # balanced split across the 2 TCs
    tm = pl.cdiv(m, grid)
    tm = ((tm + sub - 1) // sub) * sub
    return min(tm, m)


def sublayer_connection1(x, w, b, gamma, beta, *, matmul_dtype=None,
                         target_tile_bytes=2 << 20, donate_x=False):
    """forward(x) = x + Linear(LayerNorm(x))   (dropout = identity at eval).

    x: [B, S, D] (f32 or bf16; output matches x.dtype)
    w: [D, D] (in x out), b / gamma / beta: [D]
    matmul_dtype: dtype for the MXU matmul (defaults to w.dtype; bf16 is the
                  fast path on v5e/v6e/v7x).
    donate_x: only set True if the caller actually donates x; otherwise XLA
              inserts a defensive copy (extra HBM traffic on a BW-bound kernel).
    """
    B, S, D = x.shape
    M = B * S
    xf = x.reshape(M, D)

    mm_dtype = jnp.dtype(matmul_dtype) if matmul_dtype is not None else jnp.dtype(w.dtype)

    # Fold the LayerNorm affine into the Linear:
    #   LN(x) @ W + b = (xc*inv) @ (diag(gamma) @ W) + (beta @ W + b)
    w32 = w.astype(jnp.float32)
    w_fused = (gamma.astype(jnp.float32)[:, None] * w32).astype(mm_dtype)
    b_fused = (beta.astype(jnp.float32) @ w32
               + b.astype(jnp.float32)).reshape(1, D).astype(jnp.float32)

    it_x = jnp.dtype(x.dtype).itemsize
    it_w = jnp.dtype(mm_dtype).itemsize

    tm = _choose_tm(M, D, it_x, target_tile_bytes)
    grid_m = pl.cdiv(M, tm)

    # x/out tiles double-buffered; resident weight & fused bias single-buffered.
    vmem_need = 2 * 2 * tm * D * it_x + D * D * it_w + 8 * D * 4
    vmem_limit = min(max(int(vmem_need * 1.5) + (2 << 20), 24 * 1024 * 1024),
                     64 * 1024 * 1024)
    # TODO(synk): for very large D (f32 weight >= ~2048) the resident DxD weight
    # no longer fits v7x's 64 MiB VMEM; add a column-tiled grid axis over W.

    cost = pl.CostEstimate(
        flops=2 * M * D * D,
        transcendentals=2 * M,  # sqrt + reciprocal per row
        bytes_accessed=2 * M * D * it_x + D * D * it_w + 8 * D * 4,
    )

    out = pl.pallas_call(
        _sublayer_connection_kernel,
        out_shape=jax.ShapeDtypeStruct((M, D), x.dtype),
        grid_spec=pl.GridSpec(
            grid=(grid_m,),
            in_specs=[
                pl.BlockSpec((tm, D), lambda i: (i, 0)),            # x tile
                pl.BlockSpec((D, D), lambda i: (0, 0),
                             pipeline_mode=pl.Buffered(1)),         # fused weight
                pl.BlockSpec((1, D), lambda i: (0, 0),
                             pipeline_mode=pl.Buffered(1)),         # fused bias
            ],
            out_specs=pl.BlockSpec((tm, D), lambda i: (i, 0)),
        ),
        compiler_params=pltpu.CompilerParams(
            dimension_semantics=("parallel",),
            vmem_limit_bytes=vmem_limit,
        ),
        cost_estimate=cost,
        input_output_aliases=({0: 0} if donate_x else {}),
    )(xf, w_fused, b_fused)
    return out.reshape(B, S, D)


def _xavier_uniform(key, shape, dtype=jnp.float32):
    fan_in, fan_out = shape[0], shape[1]
    limit = jnp.sqrt(6.0 / (fan_in + fan_out))
    return jax.random.uniform(key, shape, dtype, minval=-limit, maxval=limit)


if __name__ == "__main__":
    # Small shapes consistent with the module (seq of hidden vectors).
    B, S, D = 2, 256, 128   # module default hidden is 768; scaled down

    key = jax.random.PRNGKey(0)
    kx, kw = jax.random.split(key)

    x = jax.random.normal(kx, (B, S, D), dtype=jnp.float32)

    # LayerNorm params: a_2 = ones, b_2 = zeros (as in LayerNorm.__init__).
    gamma = jnp.ones((D,), dtype=jnp.float32)
    beta = jnp.zeros((D,), dtype=jnp.float32)

    # Sublayer: Linear(D, D), xavier-uniform weight [in, out], zero bias.
    w = _xavier_uniform(kw, (D, D))
    b = jnp.zeros((D,), dtype=jnp.float32)

    # Unused-in-forward params from init_mBloSA (shape fidelity only).
    g_W1 = _xavier_uniform(jax.random.PRNGKey(1), (D, D))
    g_W2 = _xavier_uniform(jax.random.PRNGKey(2), (D, D))
    g_b = jnp.zeros((D,), dtype=jnp.float32)

    # Reference (exact module semantics: unbiased std, divide by std + eps).
    mean = jnp.mean(x, axis=-1, keepdims=True)
    xc = x - mean
    std = jnp.sqrt(jnp.sum(xc * xc, axis=-1, keepdims=True) / (D - 1))
    normed = gamma * xc / (std + EPS) + beta
    ref = x + (normed @ w + b)

    # ---- f32 I/O, f32 matmul (exact module semantics) ----
    out = jax.block_until_ready(sublayer_connection1(x, w, b, gamma, beta))
    assert out.shape == (B, S, D) and out.dtype == x.dtype
    assert jnp.allclose(out, ref, atol=1e-4, rtol=1e-4), "f32 path mismatch"

    # ---- bf16 I/O + bf16 matmul (HBM-bandwidth / MXU fast path) ----
    xb = x.astype(jnp.bfloat16)
    out_bf16 = jax.block_until_ready(
        sublayer_connection1(xb, w, b, gamma, beta, matmul_dtype=jnp.bfloat16))
    assert out_bf16.dtype == jnp.bfloat16
    max_err = jnp.max(jnp.abs(out_bf16.astype(jnp.float32) - ref))
    assert max_err < 0.125, f"bf16 path mismatch (max abs err {max_err})"

    print("KERNEL_OK")
</pallas_src>

<mosaic_0001>
module attributes {stable_mosaic.version = 11 : i64} {
  func.func @_sublayer_connection_kernel(%arg0: i32, %arg1: memref<256x128xf32, #tpu.memory_space<vmem>>, %arg2: memref<128x128xf32, #tpu.memory_space<vmem>>, %arg3: memref<1x128xf32, #tpu.memory_space<vmem>>, %arg4: memref<256x128xf32, #tpu.memory_space<vmem>>) attributes {dimension_semantics = [#tpu.dimension_semantics<parallel>], iteration_bounds = array<i64: 2>, scalar_prefetch = 0 : i64, scratch_operands = 0 : i64, tpu.core_type = #tpu.core_type<tc>, window_params = [{transform_indices = @transform_0, window_bounds = array<i64: 256, 128>}, {pipeline_mode = #tpu.pipeline_mode<synchronous>, transform_indices = @transform_1, window_bounds = array<i64: 128, 128>}, {pipeline_mode = #tpu.pipeline_mode<synchronous>, transform_indices = @transform_2, window_bounds = array<i64: 1, 128>}, {transform_indices = @transform_3, window_bounds = array<i64: 256, 128>}]} {
    %c0 = arith.constant 0 : index
    %c0_0 = arith.constant 0 : index
    %0 = vector.load %arg1[%c0, %c0_0] : memref<256x128xf32, #tpu.memory_space<vmem>>, vector<256x128xf32>
    %cst = arith.constant dense<0.000000e+00> : vector<256xf32>
    %1 = vector.multi_reduction <add>, %0, %cst [1] : vector<256x128xf32> to vector<256xf32>
    %2 = vector.shape_cast %1 : vector<256xf32> to vector<256x1xf32>
    %cst_1 = arith.constant 1.280000e+02 : f32
    %3 = vector.broadcast %cst_1 : f32 to vector<256x1xf32>
    %4 = arith.divf %2, %3 : vector<256x1xf32>
    %5 = vector.broadcast %4 : vector<256x1xf32> to vector<256x128xf32>
    %6 = arith.subf %0, %5 : vector<256x128xf32>
    %7 = arith.mulf %6, %6 : vector<256x128xf32>
    %cst_2 = arith.constant dense<0.000000e+00> : vector<256xf32>
    %8 = vector.multi_reduction <add>, %7, %cst_2 [1] : vector<256x128xf32> to vector<256xf32>
    %9 = vector.shape_cast %8 : vector<256xf32> to vector<256x1xf32>
    %cst_3 = arith.constant 0.00787401571 : f32
    %10 = vector.broadcast %cst_3 : f32 to vector<256x1xf32>
    %11 = arith.mulf %9, %10 : vector<256x1xf32>
    %12 = math.sqrt %11 : vector<256x1xf32>
    %cst_4 = arith.constant 9.99999997E-7 : f32
    %13 = vector.broadcast %cst_4 : f32 to vector<256x1xf32>
    %14 = arith.addf %12, %13 : vector<256x1xf32>
    %15 = tpu.reciprocal %14 : vector<256x1xf32> -> vector<256x1xf32>
    %16 = vector.broadcast %15 : vector<256x1xf32> to vector<256x128xf32>
    %17 = arith.mulf %6, %16 : vector<256x128xf32>
    %c0_5 = arith.constant 0 : index
    %c0_6 = arith.constant 0 : index
    %18 = vector.load %arg2[%c0_5, %c0_6] : memref<128x128xf32, #tpu.memory_space<vmem>>, vector<128x128xf32>
    %cst_7 = arith.constant dense<0.000000e+00> : vector<256x128xf32>
    %19 = tpu.matmul %17, %18, %cst_7 {dimension_numbers = #tpu.dot_dimension_numbers<[1], [0], [0], [1], [0, 0, 1, 1], [], []>} : vector<256x128xf32>, vector<128x128xf32>, vector<256x128xf32> -> vector<256x128xf32>
    %c0_8 = arith.constant 0 : index
    %c0_9 = arith.constant 0 : index
    %20 = vector.load %arg3[%c0_8, %c0_9] : memref<1x128xf32, #tpu.memory_space<vmem>>, vector<1x128xf32>
    %21 = vector.broadcast %20 : vector<1x128xf32> to vector<256x128xf32>
    %22 = arith.addf %19, %21 : vector<256x128xf32>
    %23 = arith.addf %0, %22 : vector<256x128xf32>
    %c0_10 = arith.constant 0 : index
    %c0_11 = arith.constant 0 : index
    %24 = vector.load %arg4[%c0_10, %c0_11] : memref<256x128xf32, #tpu.memory_space<vmem>>, vector<256x128xf32>
    tpu.vector_store %arg4[%c0_10, %c0_11], %23 {strides = array<i32>} : memref<256x128xf32, #tpu.memory_space<vmem>>, vector<256x128xf32>,
    return
  }
  func.func @transform_0(%arg0: i32) -> (i32, i32) {
    %c0_i32 = arith.constant 0 : i32
    %c0_i32_0 = arith.constant 0 : i32
    return %arg0, %c0_i32 : i32, i32
  }
  func.func @transform_1(%arg0: i32) -> (i32, i32) {
    %c0_i32 = arith.constant 0 : i32
    %c0_i32_0 = arith.constant 0 : i32
    %c0_i32_1 = arith.constant 0 : i32
    return %c0_i32, %c0_i32_0 : i32, i32
  }
  func.func @transform_2(%arg0: i32) -> (i32, i32) {
    %c0_i32 = arith.constant 0 : i32
    %c0_i32_0 = arith.constant 0 : i32
    %c0_i32_1 = arith.constant 0 : i32
    return %c0_i32, %c0_i32_0 : i32, i32
  }
  func.func @transform_3(%arg0: i32) -> (i32, i32) {
    %c0_i32 = arith.constant 0 : i32
    %c0_i32_0 = arith.constant 0 : i32
    return %arg0, %c0_i32 : i32, i32
  }
}

</mosaic_0001>

<llo_original>
// kernel: tpu_custom_call.1
$region0: #{tpu_custom_call.1}
  #allocation0 [shape = 'u32[]', space=smem, size = 0x4, offset = 0x4, fixed_abs, tag = 'smem constant byte address 0x4 - core index']
  #allocation1 [shape = 'u32[144,128]{1,0:T(1,128)}', space=vmem, size = 0x12000, scoped, tag = 'internal scratch']
  %s0 = inlined_call_operand.hbm [shape: f32[512,128], index: 0, kind: input, shape index: {}]
  %s1 = inlined_call_operand.hbm [shape: f32[128,128], index: 1, kind: input, shape index: {}]
  %s2 = inlined_call_operand.vmem [shape: f32[1,128], index: 2, kind: input, shape index: {}]
  %s3 = inlined_call_operand.hbm [shape: f32[512,128], index: 3, kind: output, shape index: {}]
  %s4 = sld [smem:[#allocation0]]
  $region53: #{tpu_custom_call.1} parent=0
    _
  %s6 = ssub.s32 1, %s4
  %s7 = scalar_select 0, %s6, %s4
  $region1: #{tpu_custom_call.1} parent=0
    #allocation2 [shape = 'u8[262144]{0}', space=vmem, size = 0x40000, scoped, tag = 'input window, operand 0']
    #allocation3 [shape = 's32[2]{0}', space=sflag, size = 0x8, scoped, tag = 'scoped memory for tpu_custom_call.1']
    #allocation4 [shape = 's32[2]{0}', space=sflag, size = 0x8, scoped, tag = 'scoped memory for tpu_custom_call.1']
    #allocation5 [shape = 'u8[65536]{0}', space=vmem, size = 0x10000, scoped, tag = 'input window, operand 1, single buffered']
    #allocation6 [shape = 's32[1]{0}', space=sflag, size = 0x4, scoped, tag = 'scoped memory for tpu_custom_call.1']
    #allocation7 [shape = 'u8[262144]{0}', space=vmem, size = 0x40000, scoped, tag = 'output window, operand 0']
    %8 = vsyncpa [#allocation3], 0
    %s9 = scalar_lea.sflag [#allocation3], 1
    %10 = vsyncpa %s9, 0
    %11 = vsyncpa [#allocation6], 0
    %12 = vsyncpa [#allocation4], 0
    %s13 = scalar_lea.sflag [#allocation4], 1
    %14 = vsyncpa %s13, 0
    loop: start=0, step=1, limit=4
    $region2: #{tpu_custom_call.1} parent=1 // loop_pre_header
      _
    $region3: #{tpu_custom_call.1} parent=1 // loop_header
      %s16 = sphi 0, %s20
      %p17 = scmp.ge.s32.totalorder %s16, 4
      %s26 = sphi 0, %s28
      %s29 = sphi 0, %s26
      %s30 = sphi 0, %s29
      %s46 = sphi 0, %s30
      %s50 = sphi 0, %s50
      %s52 = sphi 0, %s50
      %s53 = sphi 0, %s52
      %s67 = sphi 0, %s53
      %s71 = sphi 0, %s71
      %s73 = sphi 0, %s71
      %s74 = sphi 0, %s73
      %s88 = sphi 0, %s74
      %s94 = sphi 0, %s96
      %s97 = sphi 0, %s94
      %s98 = sphi 0, %s97
      %s114 = sphi 0, %s98
    $region4: #{tpu_custom_call.1} parent=1 // loop_header_branch
      %19 = sbr.rel (%p17) target = $region8
    $region5: #{tpu_custom_call.1} parent=1 // loop_body
      %s21 = ssub.s32 %s16, 1
      %s22 = ssub.s32 %s16, 2
      %s23 = sadd.s32 %s16, 1
      %s24 = ssub.s32 %s16, %s23
      %p25 = scmp.eq.s32.totalorder %s24, 0
      %s27 = sadd.s32 %s26, 1
      %s28 = scalar_select %p25, %s26, %s27
      %p31 = pneg %p25
      %p32 = scmp.eq.s32.totalorder %s16, 1
      %p33 = por %p31, %p32
      %p34 = scmp.ne.s32.totalorder %s26, %s29
      %p35 = scmp.eq.s32.totalorder %s16, 0
      %p36 = por %p34, %p35
      %p37 = scmp.ne.s32.totalorder %s26, %s29
      %p38 = scmp.eq.s32.totalorder %s21, 1
      %p39 = por %p37, %p38
      %p40 = scmp.ne.s32.totalorder %s29, %s30
      %p41 = scmp.eq.s32.totalorder %s21, 0
      %p42 = por %p40, %p41
      %p43 = scmp.ne.s32.totalorder %s29, %s30
      %p44 = scmp.eq.s32.totalorder %s22, 1
      %p45 = por %p43, %p44
      %p47 = scmp.ne.s32.totalorder %s30, %s46
      %p48 = scmp.eq.s32.totalorder %s22, 0
      %p49 = por %p47, %p48
      %s51 = sadd.s32 %s50, 1
      %p54 = scmp.eq.s32.totalorder %s16, 1
      %p55 = scmp.ne.s32.totalorder %s50, %s52
      %p56 = scmp.eq.s32.totalorder %s16, 0
      %p57 = por %p55, %p56
      %p58 = scmp.ne.s32.totalorder %s50, %s52
      %p59 = scmp.eq.s32.totalorder %s21, 1
      %p60 = por %p58, %p59
      %p61 = scmp.ne.s32.totalorder %s52, %s53
      %p62 = scmp.eq.s32.totalorder %s21, 0
      %p63 = por %p61, %p62
      %p64 = scmp.ne.s32.totalorder %s52, %s53
      %p65 = scmp.eq.s32.totalorder %s22, 1
      %p66 = por %p64, %p65
      %p68 = scmp.ne.s32.totalorder %s53, %s67
      %p69 = scmp.eq.s32.totalorder %s22, 0
      %p70 = por %p68, %p69
      %s72 = sadd.s32 %s71, 1
      %p75 = scmp.eq.s32.totalorder %s16, 1
      %p76 = scmp.ne.s32.totalorder %s71, %s73
      %p77 = scmp.eq.s32.totalorder %s16, 0
      %p78 = por %p76, %p77
      %p79 = scmp.ne.s32.totalorder %s71, %s73
      %p80 = scmp.eq.s32.totalorder %s21, 1
      %p81 = por %p79, %p80
      %p82 = scmp.ne.s32.totalorder %s73, %s74
      %p83 = scmp.eq.s32.totalorder %s21, 0
      %p84 = por %p82, %p83
      %p85 = scmp.ne.s32.totalorder %s73, %s74
      %p86 = scmp.eq.s32.totalorder %s22, 1
      %p87 = por %p85, %p86
      %p89 = scmp.ne.s32.totalorder %s74, %s88
      %p90 = scmp.eq.s32.totalorder %s22, 0
      %p91 = por %p89, %p90
      %s92 = ssub.s32 %s16, %s23
      %p93 = scmp.eq.s32.totalorder %s92, 0
      %s95 = sadd.s32 %s94, 1
      %s96 = scalar_select %p93, %s94, %s95
      %p99 = pneg %p93
      %p100 = scmp.eq.s32.totalorder %s16, 1
      %p101 = por %p99, %p100
      %p102 = scmp.ne.s32.totalorder %s94, %s97
      %p103 = scmp.eq.s32.totalorder %s16, 0
      %p104 = por %p102, %p103
      %p105 = scmp.ne.s32.totalorder %s94, %s97
      %p106 = scmp.eq.s32.totalorder %s21, 1
      %p107 = por %p105, %p106
      %p108 = scmp.ne.s32.totalorder %s97, %s98
      %p109 = scmp.eq.s32.totalorder %s21, 0
      %p110 = por %p108, %p109
      %p111 = scmp.ne.s32.totalorder %s97, %s98
      %p112 = scmp.eq.s32.totalorder %s22, 1
      %p113 = por %p111, %p112
      %p115 = scmp.ne.s32.totalorder %s98, %s114
      %p116 = scmp.eq.s32.totalorder %s22, 0
      %p117 = por %p115, %p116
      %p118 = scmp.le.s32.totalorder 1, %s16
      %p119 = scmp.lt.s32.totalorder %s16, 3
      %p120 = pnand %p118, %p119
      %p121 = pneg %p120
      // Predicated region
      $region9: #{tpu_custom_call.1} parent=5 // pred_check
        _
      $region10: #{tpu_custom_call.1} parent=5 // pred_check_branch
        %123 = sbr.rel (%p120) target = $region12
      $region11: #{tpu_custom_call.1} parent=5 // pred_region
        %s124 = ssub.s32 %s16, 1
        // Predicated region
        $region13: #{tpu_custom_call.1} parent=11 // pred_check
          %p125 = pneg %p63
        $region14: #{tpu_custom_call.1} parent=11 // pred_check_branch
          %127 = sbr.rel (%p125) target = $region16
        $region15: #{tpu_custom_call.1} parent=11 // pred_region
          %s129 = ssub.s32 2048, 2048
          %130 = vsyncadd [#allocation6], %s129
          %s131 = sshll.u32 [#allocation5], 4
          %s132 = int_to_ptr.vmem [resolvable:$true] %s131
          %137 = dma.hbm_to_vmem [thread:$0]  %s1, 2048, %s132, [#allocation6], 128, 128, 8
        $region16: #{tpu_custom_call.1} parent=11 // pred_fallthru
          _
        // Predicated region
        $region17: #{tpu_custom_call.1} parent=11 // pred_check
          %p138 = pneg %p84
        $region18: #{tpu_custom_call.1} parent=11 // pred_check_branch
          %140 = sbr.rel (%p138) target = $region20
        $region19: #{tpu_custom_call.1} parent=11 // pred_region
          _
        $region20: #{tpu_custom_call.1} parent=11 // pred_fallthru
          _
      $region12: #{tpu_custom_call.1} parent=5 // pred_fallthru
        _
      %p141 = scmp.lt.s32.totalorder %s16, 2
      // Predicated region
      $region21: #{tpu_custom_call.1} parent=5 // pred_check
        %p142 = pneg %p141
      $region22: #{tpu_custom_call.1} parent=5 // pred_check_branch
        %144 = sbr.rel (%p142) target = $region24
      $region23: #{tpu_custom_call.1} parent=5 // pred_region
        // Predicated region
        $region25: #{tpu_custom_call.1} parent=23 // pred_check
          %p145 = pneg %p36
        $region26: #{tpu_custom_call.1} parent=23 // pred_check_branch
          %147 = sbr.rel (%p145) target = $region28
        $region27: #{tpu_custom_call.1} parent=23 // pred_region
          %s148 = sand.u32 %s26, 1
          %s149 = scalar_lea.sflag [#allocation3], %s148
          %s150 = sand.u32 %s26, 1
          %s151 = smul.addr %s150, 256
          %s152 = scalar_lea.vmem [#allocation2], %s151
          %s153 = smul.u32 32, %s16
          %s155 = ssub.s32 4096, 4096
          %156 = vsyncadd %s149, %s155
          %s157 = smul.addr %s153, 128
          %s158 = scalar_lea.hbm %s0, %s157
          %s159 = sshll.u32 %s152, 4
          %s160 = int_to_ptr.vmem [resolvable:$true] %s159
          %165 = dma.hbm_to_vmem [thread:$0]  %s158, 4096, %s160, %s149, 128, 128, 8
        $region28: #{tpu_custom_call.1} parent=23 // pred_fallthru
          _
      $region24: #{tpu_custom_call.1} parent=5 // pred_fallthru
        _
      %p166 = scmp.le.s32.totalorder 1, %s16
      %p167 = scmp.lt.s32.totalorder %s16, 3
      %p168 = pnand %p166, %p167
      %p169 = pneg %p168
      // Predicated region
      $region29: #{tpu_custom_call.1} parent=5 // pred_check
        _
      $region30: #{tpu_custom_call.1} parent=5 // pred_check_branch
        %171 = sbr.rel (%p168) target = $region32
      $region31: #{tpu_custom_call.1} parent=5 // pred_region
        %s172 = ssub.s32 %s16, 1
        %s173 = sand.u32 %s29, 1
        %s174 = scalar_lea.sflag [#allocation3], %s173
        %s175 = sand.u32 %s29, 1
        %s176 = smul.addr %s175, 256
        %s177 = scalar_lea.vmem [#allocation2], %s176
        // Predicated region
        $region33: #{tpu_custom_call.1} parent=31 // pred_check
          %p178 = pneg %p42
        $region34: #{tpu_custom_call.1} parent=31 // pred_check_branch
          %180 = sbr.rel (%p178) target = $region36
        $region35: #{tpu_custom_call.1} parent=31 // pred_region
          %181 = dma.done %s174, 4096
        $region36: #{tpu_custom_call.1} parent=31 // pred_fallthru
          _
        // Predicated region
        $region37: #{tpu_custom_call.1} parent=31 // pred_check
          %p182 = pneg %p63
        $region38: #{tpu_custom_call.1} parent=31 // pred_check_branch
          %184 = sbr.rel (%p182) target = $region40
        $region39: #{tpu_custom_call.1} parent=31 // pred_region
          %185 = dma.done [#allocation6], 2048
        $region40: #{tpu_custom_call.1} parent=31 // pred_fallthru
          _
        %s186 = sand.u32 %s29, 1
        %s187 = scalar_lea.sflag [#allocation3], %s186
        %s188 = sand.u32 %s29, 1
        %s189 = smul.addr %s188, 256
        %s190 = scalar_lea.vmem [#allocation2], %s189
        %p191 = pneg %p42
        %p192 = pneg %p39
        %p193 = pneg %p63
        %p194 = pneg %p60
        %p195 = pneg %p84
        %p196 = pneg %p81
        %p197 = pneg %p110
        %p198 = pneg %p107
        %s199 = sand.u32 %s97, 1
        %s200 = scalar_lea.sflag [#allocation4], %s199
        %s201 = sand.u32 %s97, 1
        %s202 = smul.addr %s201, 256
        %s203 = scalar_lea.vmem [#allocation7], %s202
        %s204 = smul.u32 32, %s21
        %s205 = smul.u32 32, %s21
        %v206 = vld [vmem:[%s177] sm:$0xff]
        %v207 = vld [vmem:[%s177 + $0x8] sm:$0xff]
        %v208 = vld [vmem:[%s177 + $0x10] sm:$0xff]
        %v209 = vld [vmem:[%s177 + $0x18] sm:$0xff]
        %v210 = vld [vmem:[%s177 + $0x20] sm:$0xff]
        %v211 = vld [vmem:[%s177 + $0x28] sm:$0xff]
        %v212 = vld [vmem:[%s177 + $0x30] sm:$0xff]
        %v213 = vld [vmem:[%s177 + $0x38] sm:$0xff]
        %v214 = vld [vmem:[%s177 + $0x40] sm:$0xff]
        %v215 = vld [vmem:[%s177 + $0x48] sm:$0xff]
        %v216 = vld [vmem:[%s177 + $0x50] sm:$0xff]
        %v217 = vld [vmem:[%s177 + $0x58] sm:$0xff]
        %v218 = vld [vmem:[%s177 + $0x60] sm:$0xff]
        %v219 = vld [vmem:[%s177 + $0x68] sm:$0xff]
        %v220 = vld [vmem:[%s177 + $0x70] sm:$0xff]
        %v221 = vld [vmem:[%s177 + $0x78] sm:$0xff]
        %v222 = vld [vmem:[%s177 + $0x80] sm:$0xff]
        %v223 = vld [vmem:[%s177 + $0x88] sm:$0xff]
        %v224 = vld [vmem:[%s177 + $0x90] sm:$0xff]
        %v225 = vld [vmem:[%s177 + $0x98] sm:$0xff]
        %v226 = vld [vmem:[%s177 + $0xa0] sm:$0xff]
        %v227 = vld [vmem:[%s177 + $0xa8] sm:$0xff]
        %v228 = vld [vmem:[%s177 + $0xb0] sm:$0xff]
        %v229 = vld [vmem:[%s177 + $0xb8] sm:$0xff]
        %v230 = vld [vmem:[%s177 + $0xc0] sm:$0xff]
        %v231 = vld [vmem:[%s177 + $0xc8] sm:$0xff]
        %v232 = vld [vmem:[%s177 + $0xd0] sm:$0xff]
        %v233 = vld [vmem:[%s177 + $0xd8] sm:$0xff]
        %v234 = vld [vmem:[%s177 + $0xe0] sm:$0xff]
        %v235 = vld [vmem:[%s177 + $0xe8] sm:$0xff]
        %v236 = vld [vmem:[%s177 + $0xf0] sm:$0xff]
        %v237 = vld [vmem:[%s177 + $0xf8] sm:$0xff]
        %238 = vadd.xlane.f32.xlu0 %v206
        %v239 = vpop.xlane.xlu0 %238
        %240 = vadd.xlane.f32.xlu0 %v207
        %v241 = vpop.xlane.xlu0 %240
        %242 = vadd.xlane.f32.xlu0 %v208
        %v243 = vpop.xlane.xlu0 %242
        %244 = vadd.xlane.f32.xlu0 %v209
        %v245 = vpop.xlane.xlu0 %244
        %246 = vadd.xlane.f32.xlu0 %v210
        %v247 = vpop.xlane.xlu0 %246
        %248 = vadd.xlane.f32.xlu0 %v211
        %v249 = vpop.xlane.xlu0 %248
        %250 = vadd.xlane.f32.xlu0 %v212
        %v251 = vpop.xlane.xlu0 %250
        %252 = vadd.xlane.f32.xlu0 %v213
        %v253 = vpop.xlane.xlu0 %252
        %254 = vadd.xlane.f32.xlu0 %v214
        %v255 = vpop.xlane.xlu0 %254
        %256 = vadd.xlane.f32.xlu0 %v215
        %v257 = vpop.xlane.xlu0 %256
        %258 = vadd.xlane.f32.xlu0 %v216
        %v259 = vpop.xlane.xlu0 %258
        %260 = vadd.xlane.f32.xlu0 %v217
        %v261 = vpop.xlane.xlu0 %260
        %262 = vadd.xlane.f32.xlu0 %v218
        %v263 = vpop.xlane.xlu0 %262
        %264 = vadd.xlane.f32.xlu0 %v219
        %v265 = vpop.xlane.xlu0 %264
        %266 = vadd.xlane.f32.xlu0 %v220
        %v267 = vpop.xlane.xlu0 %266
        %268 = vadd.xlane.f32.xlu0 %v221
        %v269 = vpop.xlane.xlu0 %268
        %270 = vadd.xlane.f32.xlu0 %v222
        %v271 = vpop.xlane.xlu0 %270
        %272 = vadd.xlane.f32.xlu0 %v223
        %v273 = vpop.xlane.xlu0 %272
        %274 = vadd.xlane.f32.xlu0 %v224
        %v275 = vpop.xlane.xlu0 %274
        %276 = vadd.xlane.f32.xlu0 %v225
        %v277 = vpop.xlane.xlu0 %276
        %278 = vadd.xlane.f32.xlu0 %v226
        %v279 = vpop.xlane.xlu0 %278
        %280 = vadd.xlane.f32.xlu0 %v227
        %v281 = vpop.xlane.xlu0 %280
        %282 = vadd.xlane.f32.xlu0 %v228
        %v283 = vpop.xlane.xlu0 %282
        %284 = vadd.xlane.f32.xlu0 %v229
        %v285 = vpop.xlane.xlu0 %284
        %286 = vadd.xlane.f32.xlu0 %v230
        %v287 = vpop.xlane.xlu0 %286
        %288 = vadd.xlane.f32.xlu0 %v231
        %v289 = vpop.xlane.xlu0 %288
        %290 = vadd.xlane.f32.xlu0 %v232
        %v291 = vpop.xlane.xlu0 %290
        %292 = vadd.xlane.f32.xlu0 %v233
        %v293 = vpop.xlane.xlu0 %292
        %294 = vadd.xlane.f32.xlu0 %v234
        %v295 = vpop.xlane.xlu0 %294
        %296 = vadd.xlane.f32.xlu0 %v235
        %v297 = vpop.xlane.xlu0 %296
        %298 = vadd.xlane.f32.xlu0 %v236
        %v299 = vpop.xlane.xlu0 %298
        %300 = vadd.xlane.f32.xlu0 %v237
        %v301 = vpop.xlane.xlu0 %300
        %v302 = vrcp.pop 128.0
        %v303 = vmul.f32 %v239, %v302
        %v304 = vmul.f32 %v241, %v302
        %v305 = vmul.f32 %v243, %v302
        %v306 = vmul.f32 %v245, %v302
        %v307 = vmul.f32 %v247, %v302
        %v308 = vmul.f32 %v249, %v302
        %v309 = vmul.f32 %v251, %v302
        %v310 = vmul.f32 %v253, %v302
        %v311 = vmul.f32 %v255, %v302
        %v312 = vmul.f32 %v257, %v302
        %v313 = vmul.f32 %v259, %v302
        %v314 = vmul.f32 %v261, %v302
        %v315 = vmul.f32 %v263, %v302
        %v316 = vmul.f32 %v265, %v302
        %v317 = vmul.f32 %v267, %v302
        %v318 = vmul.f32 %v269, %v302
        %v319 = vmul.f32 %v271, %v302
        %v320 = vmul.f32 %v273, %v302
        %v321 = vmul.f32 %v275, %v302
        %v322 = vmul.f32 %v277, %v302
        %v323 = vmul.f32 %v279, %v302
        %v324 = vmul.f32 %v281, %v302
        %v325 = vmul.f32 %v283, %v302
        %v326 = vmul.f32 %v285, %v302
        %v327 = vmul.f32 %v287, %v302
        %v328 = vmul.f32 %v289, %v302
        %v329 = vmul.f32 %v291, %v302
        %v330 = vmul.f32 %v293, %v302
        %v331 = vmul.f32 %v295, %v302
        %v332 = vmul.f32 %v297, %v302
        %v333 = vmul.f32 %v299, %v302
        %v334 = vmul.f32 %v301, %v302
        %v335 = vsub.f32 %v206, %v303
        %v336 = vsub.f32 %v207, %v304
        %v337 = vsub.f32 %v208, %v305
        %v338 = vsub.f32 %v209, %v306
        %v339 = vsub.f32 %v210, %v307
        %v340 = vsub.f32 %v211, %v308
        %v341 = vsub.f32 %v212, %v309
        %v342 = vsub.f32 %v213, %v310
        %v343 = vsub.f32 %v214, %v311
        %v344 = vsub.f32 %v215, %v312
        %v345 = vsub.f32 %v216, %v313
        %v346 = vsub.f32 %v217, %v314
        %v347 = vsub.f32 %v218, %v315
        %v348 = vsub.f32 %v219, %v316
        %v349 = vsub.f32 %v220, %v317
        %v350 = vsub.f32 %v221, %v318
        %v351 = vsub.f32 %v222, %v319
        %v352 = vsub.f32 %v223, %v320
        %v353 = vsub.f32 %v224, %v321
        %v354 = vsub.f32 %v225, %v322
        %v355 = vsub.f32 %v226, %v323
        %v356 = vsub.f32 %v227, %v324
        %v357 = vsub.f32 %v228, %v325
        %v358 = vsub.f32 %v229, %v326
        %v359 = vsub.f32 %v230, %v327
        %v360 = vsub.f32 %v231, %v328
        %v361 = vsub.f32 %v232, %v329
        %v362 = vsub.f32 %v233, %v330
        %v363 = vsub.f32 %v234, %v331
        %v364 = vsub.f32 %v235, %v332
        %v365 = vsub.f32 %v236, %v333
        %v366 = vsub.f32 %v237, %v334
        %v367 = vmul.f32 %v335, %v335
        %v368 = vmul.f32 %v336, %v336
        %v369 = vmul.f32 %v337, %v337
        %v370 = vmul.f32 %v338, %v338
        %v371 = vmul.f32 %v339, %v339
        %v372 = vmul.f32 %v340, %v340
        %v373 = vmul.f32 %v341, %v341
        %v374 = vmul.f32 %v342, %v342
        %v375 = vmul.f32 %v343, %v343
        %v376 = vmul.f32 %v344, %v344
        %v377 = vmul.f32 %v345, %v345
        %v378 = vmul.f32 %v346, %v346
        %v379 = vmul.f32 %v347, %v347
        %v380 = vmul.f32 %v348, %v348
        %v381 = vmul.f32 %v349, %v349
        %v382 = vmul.f32 %v350, %v350
        %v383 = vmul.f32 %v351, %v351
        %v384 = vmul.f32 %v352, %v352
        %v385 = vmul.f32 %v353, %v353
        %v386 = vmul.f32 %v354, %v354
        %v387 = vmul.f32 %v355, %v355
        %v388 = vmul.f32 %v356, %v356
        %v389 = vmul.f32 %v357, %v357
        %v390 = vmul.f32 %v358, %v358
        %v391 = vmul.f32 %v359, %v359
        %v392 = vmul.f32 %v360, %v360
        %v393 = vmul.f32 %v361, %v361
        %v394 = vmul.f32 %v362, %v362
        %v395 = vmul.f32 %v363, %v363
        %v396 = vmul.f32 %v364, %v364
        %v397 = vmul.f32 %v365, %v365
        %v398 = vmul.f32 %v366, %v366
        %399 = vadd.xlane.f32.xlu0 %v367
        %v400 = vpop.xlane.xlu0 %399
        %401 = vadd.xlane.f32.xlu0 %v368
        %v402 = vpop.xlane.xlu0 %401
        %403 = vadd.xlane.f32.xlu0 %v369
        %v404 = vpop.xlane.xlu0 %403
        %405 = vadd.xlane.f32.xlu0 %v370
        %v406 = vpop.xlane.xlu0 %405
        %407 = vadd.xlane.f32.xlu0 %v371
        %v408 = vpop.xlane.xlu0 %407
        %409 = vadd.xlane.f32.xlu0 %v372
        %v410 = vpop.xlane.xlu0 %409
        %411 = vadd.xlane.f32.xlu0 %v373
        %v412 = vpop.xlane.xlu0 %411
        %413 = vadd.xlane.f32.xlu0 %v374
        %v414 = vpop.xlane.xlu0 %413
        %415 = vadd.xlane.f32.xlu0 %v375
        %v416 = vpop.xlane.xlu0 %415
        %417 = vadd.xlane.f32.xlu0 %v376
        %v418 = vpop.xlane.xlu0 %417
        %419 = vadd.xlane.f32.xlu0 %v377
        %v420 = vpop.xlane.xlu0 %419
        %421 = vadd.xlane.f32.xlu0 %v378
        %v422 = vpop.xlane.xlu0 %421
        %423 = vadd.xlane.f32.xlu0 %v379
        %v424 = vpop.xlane.xlu0 %423
        %425 = vadd.xlane.f32.xlu0 %v380
        %v426 = vpop.xlane.xlu0 %425
        %427 = vadd.xlane.f32.xlu0 %v381
        %v428 = vpop.xlane.xlu0 %427
        %429 = vadd.xlane.f32.xlu0 %v382
        %v430 = vpop.xlane.xlu0 %429
        %431 = vadd.xlane.f32.xlu0 %v383
        %v432 = vpop.xlane.xlu0 %431
        %433 = vadd.xlane.f32.xlu0 %v384
        %v434 = vpop.xlane.xlu0 %433
        %435 = vadd.xlane.f32.xlu0 %v385
        %v436 = vpop.xlane.xlu0 %435
        %437 = vadd.xlane.f32.xlu0 %v386
        %v438 = vpop.xlane.xlu0 %437
        %439 = vadd.xlane.f32.xlu0 %v387
        %v440 = vpop.xlane.xlu0 %439
        %441 = vadd.xlane.f32.xlu0 %v388
        %v442 = vpop.xlane.xlu0 %441
        %443 = vadd.xlane.f32.xlu0 %v389
        %v444 = vpop.xlane.xlu0 %443
        %445 = vadd.xlane.f32.xlu0 %v390
        %v446 = vpop.xlane.xlu0 %445
        %447 = vadd.xlane.f32.xlu0 %v391
        %v448 = vpop.xlane.xlu0 %447
        %449 = vadd.xlane.f32.xlu0 %v392
        %v450 = vpop.xlane.xlu0 %449
        %451 = vadd.xlane.f32.xlu0 %v393
        %v452 = vpop.xlane.xlu0 %451
        %453 = vadd.xlane.f32.xlu0 %v394
        %v454 = vpop.xlane.xlu0 %453
        %455 = vadd.xlane.f32.xlu0 %v395
        %v456 = vpop.xlane.xlu0 %455
        %457 = vadd.xlane.f32.xlu0 %v396
        %v458 = vpop.xlane.xlu0 %457
        %459 = vadd.xlane.f32.xlu0 %v397
        %v460 = vpop.xlane.xlu0 %459
        %461 = vadd.xlane.f32.xlu0 %v398
        %v462 = vpop.xlane.xlu0 %461
        %v463 = vmul.f32 %v400, 0.007874016
        %v464 = vmul.f32 %v402, 0.007874016
        %v465 = vmul.f32 %v404, 0.007874016
        %v466 = vmul.f32 %v406, 0.007874016
        %v467 = vmul.f32 %v408, 0.007874016
        %v468 = vmul.f32 %v410, 0.007874016
        %v469 = vmul.f32 %v412, 0.007874016
        %v470 = vmul.f32 %v414, 0.007874016
        %v471 = vmul.f32 %v416, 0.007874016
        %v472 = vmul.f32 %v418, 0.007874016
        %v473 = vmul.f32 %v420, 0.007874016
        %v474 = vmul.f32 %v422, 0.007874016
        %v475 = vmul.f32 %v424, 0.007874016
        %v476 = vmul.f32 %v426, 0.007874016
        %v477 = vmul.f32 %v428, 0.007874016
        %v478 = vmul.f32 %v430, 0.007874016
        %v479 = vmul.f32 %v432, 0.007874016
        %v480 = vmul.f32 %v434, 0.007874016
        %v481 = vmul.f32 %v436, 0.007874016
        %v482 = vmul.f32 %v438, 0.007874016
        %v483 = vmul.f32 %v440, 0.007874016
        %v484 = vmul.f32 %v442, 0.007874016
        %v485 = vmul.f32 %v444, 0.007874016
        %v486 = vmul.f32 %v446, 0.007874016
        %v487 = vmul.f32 %v448, 0.007874016
        %v488 = vmul.f32 %v450, 0.007874016
        %v489 = vmul.f32 %v452, 0.007874016
        %v490 = vmul.f32 %v454, 0.007874016
        %v491 = vmul.f32 %v456, 0.007874016
        %v492 = vmul.f32 %v458, 0.007874016
        %v493 = vmul.f32 %v460, 0.007874016
        %v494 = vmul.f32 %v462, 0.007874016
        %v495 = vrsqrt.pop %v463
        %v496 = vmul.f32 %v463, %v495
        %vm497 = vcmp.eq.f32.partialorder %v463, inf
        %v498 = vsel %vm497, %v463, %v496
        %vm499 = vcmp.eq.f32.partialorder %v463, 0.0
        %v500 = vand.u32 %v463, 2147483648
        %v501 = vsel %vm499, %v500, %v498
        %v502 = vrsqrt.pop %v464
        %v503 = vmul.f32 %v464, %v502
        %vm504 = vcmp.eq.f32.partialorder %v464, inf
        %v505 = vsel %vm504, %v464, %v503
        %vm506 = vcmp.eq.f32.partialorder %v464, 0.0
        %v507 = vand.u32 %v464, 2147483648
        %v508 = vsel %vm506, %v507, %v505
        %v509 = vrsqrt.pop %v465
        %v510 = vmul.f32 %v465, %v509
        %vm511 = vcmp.eq.f32.partialorder %v465, inf
        %v512 = vsel %vm511, %v465, %v510
        %vm513 = vcmp.eq.f32.partialorder %v465, 0.0
        %v514 = vand.u32 %v465, 2147483648
        %v515 = vsel %vm513, %v514, %v512
        %v516 = vrsqrt.pop %v466
        %v517 = vmul.f32 %v466, %v516
        %vm518 = vcmp.eq.f32.partialorder %v466, inf
        %v519 = vsel %vm518, %v466, %v517
        %vm520 = vcmp.eq.f32.partialorder %v466, 0.0
        %v521 = vand.u32 %v466, 2147483648
        %v522 = vsel %vm520, %v521, %v519
        %v523 = vrsqrt.pop %v467
        %v524 = vmul.f32 %v467, %v523
        %vm525 = vcmp.eq.f32.partialorder %v467, inf
        %v526 = vsel %vm525, %v467, %v524
        %vm527 = vcmp.eq.f32.partialorder %v467, 0.0
        %v528 = vand.u32 %v467, 2147483648
        %v529 = vsel %vm527, %v528, %v526
        %v530 = vrsqrt.pop %v468
        %v531 = vmul.f32 %v468, %v530
        %vm532 = vcmp.eq.f32.partialorder %v468, inf
        %v533 = vsel %vm532, %v468, %v531
        %vm534 = vcmp.eq.f32.partialorder %v468, 0.0
        %v535 = vand.u32 %v468, 2147483648
        %v536 = vsel %vm534, %v535, %v533
        %v537 = vrsqrt.pop %v469
        %v538 = vmul.f32 %v469, %v537
        %vm539 = vcmp.eq.f32.partialorder %v469, inf
        %v540 = vsel %vm539, %v469, %v538
        %vm541 = vcmp.eq.f32.partialorder %v469, 0.0
        %v542 = vand.u32 %v469, 2147483648
        %v543 = vsel %vm541, %v542, %v540
        %v544 = vrsqrt.pop %v470
        %v545 = vmul.f32 %v470, %v544
        %vm546 = vcmp.eq.f32.partialorder %v470, inf
        %v547 = vsel %vm546, %v470, %v545
        %vm548 = vcmp.eq.f32.partialorder %v470, 0.0
        %v549 = vand.u32 %v470, 2147483648
        %v550 = vsel %vm548, %v549, %v547
        %v551 = vrsqrt.pop %v471
        %v552 = vmul.f32 %v471, %v551
        %vm553 = vcmp.eq.f32.partialorder %v471, inf
        %v554 = vsel %vm553, %v471, %v552
        %vm555 = vcmp.eq.f32.partialorder %v471, 0.0
        %v556 = vand.u32 %v471, 2147483648
        %v557 = vsel %vm555, %v556, %v554
        %v558 = vrsqrt.pop %v472
        %v559 = vmul.f32 %v472, %v558
        %vm560 = vcmp.eq.f32.partialorder %v472, inf
        %v561 = vsel %vm560, %v472, %v559
        %vm562 = vcmp.eq.f32.partialorder %v472, 0.0
        %v563 = vand.u32 %v472, 2147483648
        %v564 = vsel %vm562, %v563, %v561
        %v565 = vrsqrt.pop %v473
        %v566 = vmul.f32 %v473, %v565
        %vm567 = vcmp.eq.f32.partialorder %v473, inf
        %v568 = vsel %vm567, %v473, %v566
        %vm569 = vcmp.eq.f32.partialorder %v473, 0.0
        %v570 = vand.u32 %v473, 2147483648
        %v571 = vsel %vm569, %v570, %v568
        %v572 = vrsqrt.pop %v474
        %v573 = vmul.f32 %v474, %v572
        %vm574 = vcmp.eq.f32.partialorder %v474, inf
        %v575 = vsel %vm574, %v474, %v573
        %vm576 = vcmp.eq.f32.partialorder %v474, 0.0
        %v577 = vand.u32 %v474, 2147483648
        %v578 = vsel %vm576, %v577, %v575
        %v579 = vrsqrt.pop %v475
        %v580 = vmul.f32 %v475, %v579
        %vm581 = vcmp.eq.f32.partialorder %v475, inf
        %v582 = vsel %vm581, %v475, %v580
        %vm583 = vcmp.eq.f32.partialorder %v475, 0.0
        %v584 = vand.u32 %v475, 2147483648
        %v585 = vsel %vm583, %v584, %v582
        %v586 = vrsqrt.pop %v476
        %v587 = vmul.f32 %v476, %v586
        %vm588 = vcmp.eq.f32.partialorder %v476, inf
        %v589 = vsel %vm588, %v476, %v587
        %vm590 = vcmp.eq.f32.partialorder %v476, 0.0
        %v591 = vand.u32 %v476, 2147483648
        %v592 = vsel %vm590, %v591, %v589
        %v593 = vrsqrt.pop %v477
        %v594 = vmul.f32 %v477, %v593
        %vm595 = vcmp.eq.f32.partialorder %v477, inf
        %v596 = vsel %vm595, %v477, %v594
        %vm597 = vcmp.eq.f32.partialorder %v477, 0.0
        %v598 = vand.u32 %v477, 2147483648
        %v599 = vsel %vm597, %v598, %v596
        %v600 = vrsqrt.pop %v478
        %v601 = vmul.f32 %v478, %v600
        %vm602 = vcmp.eq.f32.partialorder %v478, inf
        %v603 = vsel %vm602, %v478, %v601
        %vm604 = vcmp.eq.f32.partialorder %v478, 0.0
        %v605 = vand.u32 %v478, 2147483648
        %v606 = vsel %vm604, %v605, %v603
        %v607 = vrsqrt.pop %v479
        %v608 = vmul.f32 %v479, %v607
        %vm609 = vcmp.eq.f32.partialorder %v479, inf
        %v610 = vsel %vm609, %v479, %v608
        %vm611 = vcmp.eq.f32.partialorder %v479, 0.0
        %v612 = vand.u32 %v479, 2147483648
        %v613 = vsel %vm611, %v612, %v610
        %v614 = vrsqrt.pop %v480
        %v615 = vmul.f32 %v480, %v614
        %vm616 = vcmp.eq.f32.partialorder %v480, inf
        %v617 = vsel %vm616, %v480, %v615
        %vm618 = vcmp.eq.f32.partialorder %v480, 0.0
        %v619 = vand.u32 %v480, 2147483648
        %v620 = vsel %vm618, %v619, %v617
        %v621 = vrsqrt.pop %v481
        %v622 = vmul.f32 %v481, %v621
        %vm623 = vcmp.eq.f32.partialorder %v481, inf
        %v624 = vsel %vm623, %v481, %v622
        %vm625 = vcmp.eq.f32.partialorder %v481, 0.0
        %v626 = vand.u32 %v481, 2147483648
        %v627 = vsel %vm625, %v626, %v624
        %v628 = vrsqrt.pop %v482
        %v629 = vmul.f32 %v482, %v628
        %vm630 = vcmp.eq.f32.partialorder %v482, inf
        %v631 = vsel %vm630, %v482, %v629
        %vm632 = vcmp.eq.f32.partialorder %v482, 0.0
        %v633 = vand.u32 %v482, 2147483648
        %v634 = vsel %vm632, %v633, %v631
        %v635 = vrsqrt.pop %v483
        %v636 = vmul.f32 %v483, %v635
        %vm637 = vcmp.eq.f32.partialorder %v483, inf
        %v638 = vsel %vm637, %v483, %v636
        %vm639 = vcmp.eq.f32.partialorder %v483, 0.0
        %v640 = vand.u32 %v483, 2147483648
        %v641 = vsel %vm639, %v640, %v638
        %v642 = vrsqrt.pop %v484
        %v643 = vmul.f32 %v484, %v642
        %vm644 = vcmp.eq.f32.partialorder %v484, inf
        %v645 = vsel %vm644, %v484, %v643
        %vm646 = vcmp.eq.f32.partialorder %v484, 0.0
        %v647 = vand.u32 %v484, 2147483648
        %v648 = vsel %vm646, %v647, %v645
        %v649 = vrsqrt.pop %v485
        %v650 = vmul.f32 %v485, %v649
        %vm651 = vcmp.eq.f32.partialorder %v485, inf
        %v652 = vsel %vm651, %v485, %v650
        %vm653 = vcmp.eq.f32.partialorder %v485, 0.0
        %v654 = vand.u32 %v485, 2147483648
        %v655 = vsel %vm653, %v654, %v652
        %v656 = vrsqrt.pop %v486
        %v657 = vmul.f32 %v486, %v656
        %vm658 = vcmp.eq.f32.partialorder %v486, inf
        %v659 = vsel %vm658, %v486, %v657
        %vm660 = vcmp.eq.f32.partialorder %v486, 0.0
        %v661 = vand.u32 %v486, 2147483648
        %v662 = vsel %vm660, %v661, %v659
        %v663 = vrsqrt.pop %v487
        %v664 = vmul.f32 %v487, %v663
        %vm665 = vcmp.eq.f32.partialorder %v487, inf
        %v666 = vsel %vm665, %v487, %v664
        %vm667 = vcmp.eq.f32.partialorder %v487, 0.0
        %v668 = vand.u32 %v487, 2147483648
        %v669 = vsel %vm667, %v668, %v666
        %v670 = vrsqrt.pop %v488
        %v671 = vmul.f32 %v488, %v670
        %vm672 = vcmp.eq.f32.partialorder %v488, inf
        %v673 = vsel %vm672, %v488, %v671
        %vm674 = vcmp.eq.f32.partialorder %v488, 0.0
        %v675 = vand.u32 %v488, 2147483648
        %v676 = vsel %vm674, %v675, %v673
        %v677 = vrsqrt.pop %v489
        %v678 = vmul.f32 %v489, %v677
        %vm679 = vcmp.eq.f32.partialorder %v489, inf
        %v680 = vsel %vm679, %v489, %v678
        %vm681 = vcmp.eq.f32.partialorder %v489, 0.0
        %v682 = vand.u32 %v489, 2147483648
        %v683 = vsel %vm681, %v682, %v680
        %v684 = vrsqrt.pop %v490
        %v685 = vmul.f32 %v490, %v684
        %vm686 = vcmp.eq.f32.partialorder %v490, inf
        %v687 = vsel %vm686, %v490, %v685
        %vm688 = vcmp.eq.f32.partialorder %v490, 0.0
        %v689 = vand.u32 %v490, 2147483648
        %v690 = vsel %vm688, %v689, %v687
        %v691 = vrsqrt.pop %v491
        %v692 = vmul.f32 %v491, %v691
        %vm693 = vcmp.eq.f32.partialorder %v491, inf
        %v694 = vsel %vm693, %v491, %v692
        %vm695 = vcmp.eq.f32.partialorder %v491, 0.0
        %v696 = vand.u32 %v491, 2147483648
        %v697 = vsel %vm695, %v696, %v694
        %v698 = vrsqrt.pop %v492
        %v699 = vmul.f32 %v492, %v698
        %vm700 = vcmp.eq.f32.partialorder %v492, inf
        %v701 = vsel %vm700, %v492, %v699
        %vm702 = vcmp.eq.f32.partialorder %v492, 0.0
        %v703 = vand.u32 %v492, 2147483648
        %v704 = vsel %vm702, %v703, %v701
        %v705 = vrsqrt.pop %v493
        %v706 = vmul.f32 %v493, %v705
        %vm707 = vcmp.eq.f32.partialorder %v493, inf
        %v708 = vsel %vm707, %v493, %v706
        %vm709 = vcmp.eq.f32.partialorder %v493, 0.0
        %v710 = vand.u32 %v493, 2147483648
        %v711 = vsel %vm709, %v710, %v708
        %v712 = vrsqrt.pop %v494
        %v713 = vmul.f32 %v494, %v712
        %vm714 = vcmp.eq.f32.partialorder %v494, inf
        %v715 = vsel %vm714, %v494, %v713
        %vm716 = vcmp.eq.f32.partialorder %v494, 0.0
        %v717 = vand.u32 %v494, 2147483648
        %v718 = vsel %vm716, %v717, %v715
        %v719 = vadd.f32 %v501, 1e-06
        %v720 = vadd.f32 %v508, 1e-06
        %v721 = vadd.f32 %v515, 1e-06
        %v722 = vadd.f32 %v522, 1e-06
        %v723 = vadd.f32 %v529, 1e-06
        %v724 = vadd.f32 %v536, 1e-06
        %v725 = vadd.f32 %v543, 1e-06
        %v726 = vadd.f32 %v550, 1e-06
        %v727 = vadd.f32 %v557, 1e-06
        %v728 = vadd.f32 %v564, 1e-06
        %v729 = vadd.f32 %v571, 1e-06
        %v730 = vadd.f32 %v578, 1e-06
        %v731 = vadd.f32 %v585, 1e-06
        %v732 = vadd.f32 %v592, 1e-06
        %v733 = vadd.f32 %v599, 1e-06
        %v734 = vadd.f32 %v606, 1e-06
        %v735 = vadd.f32 %v613, 1e-06
        %v736 = vadd.f32 %v620, 1e-06
        %v737 = vadd.f32 %v627, 1e-06
        %v738 = vadd.f32 %v634, 1e-06
        %v739 = vadd.f32 %v641, 1e-06
        %v740 = vadd.f32 %v648, 1e-06
        %v741 = vadd.f32 %v655, 1e-06
        %v742 = vadd.f32 %v662, 1e-06
        %v743 = vadd.f32 %v669, 1e-06
        %v744 = vadd.f32 %v676, 1e-06
        %v745 = vadd.f32 %v683, 1e-06
        %v746 = vadd.f32 %v690, 1e-06
        %v747 = vadd.f32 %v697, 1e-06
        %v748 = vadd.f32 %v704, 1e-06
        %v749 = vadd.f32 %v711, 1e-06
        %v750 = vadd.f32 %v718, 1e-06
        %v751 = vrcp.pop %v719
        %v752 = vrcp.pop %v720
        %v753 = vrcp.pop %v721
        %v754 = vrcp.pop %v722
        %v755 = vrcp.pop %v723
        %v756 = vrcp.pop %v724
        %v757 = vrcp.pop %v725
        %v758 = vrcp.pop %v726
        %v759 = vrcp.pop %v727
        %v760 = vrcp.pop %v728
        %v761 = vrcp.pop %v729
        %v762 = vrcp.pop %v730
        %v763 = vrcp.pop %v731
        %v764 = vrcp.pop %v732
        %v765 = vrcp.pop %v733
        %v766 = vrcp.pop %v734
        %v767 = vrcp.pop %v735
        %v768 = vrcp.pop %v736
        %v769 = vrcp.pop %v737
        %v770 = vrcp.pop %v738
        %v771 = vrcp.pop %v739
        %v772 = vrcp.pop %v740
        %v773 = vrcp.pop %v741
        %v774 = vrcp.pop %v742
        %v775 = vrcp.pop %v743
        %v776 = vrcp.pop %v744
        %v777 = vrcp.pop %v745
        %v778 = vrcp.pop %v746
        %v779 = vrcp.pop %v747
        %v780 = vrcp.pop %v748
        %v781 = vrcp.pop %v749
        %v782 = vrcp.pop %v750
        %v783 = vmul.f32 %v335, %v751
        %v784 = vmul.f32 %v336, %v752
        %v785 = vmul.f32 %v337, %v753
        %v786 = vmul.f32 %v338, %v754
        %v787 = vmul.f32 %v339, %v755
        %v788 = vmul.f32 %v340, %v756
        %v789 = vmul.f32 %v341, %v757
        %v790 = vmul.f32 %v342, %v758
        %v791 = vmul.f32 %v343, %v759
        %v792 = vmul.f32 %v344, %v760
        %v793 = vmul.f32 %v345, %v761
        %v794 = vmul.f32 %v346, %v762
        %v795 = vmul.f32 %v347, %v763
        %v796 = vmul.f32 %v348, %v764
        %v797 = vmul.f32 %v349, %v765
        %v798 = vmul.f32 %v350, %v766
        %v799 = vmul.f32 %v351, %v767
        %v800 = vmul.f32 %v352, %v768
        %v801 = vmul.f32 %v353, %v769
        %v802 = vmul.f32 %v354, %v770
        %v803 = vmul.f32 %v355, %v771
        %v804 = vmul.f32 %v356, %v772
        %v805 = vmul.f32 %v357, %v773
        %v806 = vmul.f32 %v358, %v774
        %v807 = vmul.f32 %v359, %v775
        %v808 = vmul.f32 %v360, %v776
        %v809 = vmul.f32 %v361, %v777
        %v810 = vmul.f32 %v362, %v778
        %v811 = vmul.f32 %v363, %v779
        %v812 = vmul.f32 %v364, %v780
        %v813 = vmul.f32 %v365, %v781
        %v814 = vmul.f32 %v366, %v782
        %v815 = vld [vmem:[#allocation5] sm:$0xff]
        %v816 = vld [vmem:[#allocation5 + $0x8] sm:$0xff]
        %v817 = vld [vmem:[#allocation5 + $0x10] sm:$0xff]
        %v818 = vld [vmem:[#allocation5 + $0x18] sm:$0xff]
        %v819 = vld [vmem:[#allocation5 + $0x20] sm:$0xff]
        %v820 = vld [vmem:[#allocation5 + $0x28] sm:$0xff]
        %v821 = vld [vmem:[#allocation5 + $0x30] sm:$0xff]
        %v822 = vld [vmem:[#allocation5 + $0x38] sm:$0xff]
        %v823 = vld [vmem:[#allocation5 + $0x40] sm:$0xff]
        %v824 = vld [vmem:[#allocation5 + $0x48] sm:$0xff]
        %v825 = vld [vmem:[#allocation5 + $0x50] sm:$0xff]
        %v826 = vld [vmem:[#allocation5 + $0x58] sm:$0xff]
        %v827 = vld [vmem:[#allocation5 + $0x60] sm:$0xff]
        %v828 = vld [vmem:[#allocation5 + $0x68] sm:$0xff]
        %v829 = vld [vmem:[#allocation5 + $0x70] sm:$0xff]
        %v830 = vld [vmem:[#allocation5 + $0x78] sm:$0xff]
        %v831 = vld [vmem:[%s2] sm:$0x1]
        %v833 = vlaneseq
        %v834 = vshrl.u32 %v833, 7
        %v835 = vsub.s32 0, %v834
        %v836 = vrot.slane %v831, %v835
        %838 = vmatprep.subr.mxu0 0.0
        %839 = vmatpush1.msra.mxu0 %v830
        %840 = vmatprep.subr.mxu0 0.0
        %841 = vmatpush1.msra.mxu0 %v829
        %842 = vmatprep.subr.mxu0 0.0
        %843 = vmatpush1.msra.mxu0 %v828
        %844 = vmatprep.subr.mxu0 0.0
        %845 = vmatpush1.msra.mxu0 %v827
        %846 = vmatprep.subr.mxu0 0.0
        %847 = vmatpush1.msra.mxu0 %v826
        %848 = vmatprep.subr.mxu0 0.0
        %849 = vmatpush1.msra.mxu0 %v825
        %850 = vmatprep.subr.mxu0 0.0
        %851 = vmatpush1.msra.mxu0 %v824
        %852 = vmatprep.subr.mxu0 0.0
        %853 = vmatpush1.msra.mxu0 %v823
        %854 = vmatprep.subr.mxu0 0.0
        %855 = vmatpush1.msra.mxu0 %v822
        %856 = vmatprep.subr.mxu0 0.0
        %857 = vmatpush1.msra.mxu0 %v821
        %858 = vmatprep.subr.mxu0 0.0
        %859 = vmatpush1.msra.mxu0 %v820
        %860 = vmatprep.subr.mxu0 0.0
        %861 = vmatpush1.msra.mxu0 %v819
        %862 = vmatprep.subr.mxu0 0.0
        %863 = vmatpush1.msra.mxu0 %v818
        %864 = vmatprep.subr.mxu0 0.0
        %865 = vmatpush1.msra.mxu0 %v817
        %866 = vmatprep.subr.mxu0 0.0
        %867 = vmatpush1.msra.mxu0 %v816
        %868 = vmatprep.subr.mxu0 0.0
        %869 = vmatpush1.msra.mxu0 %v815
        %870 = vmatprep.subr.mxu0 0.0
        %871 = vmatpush2.msra.mxu0 0.0
        %872 = vmatprep.subr.mxu0 0.0
        %873 = vmatpush2.msra.mxu0 0.0
        %874 = vmatprep.subr.mxu0 0.0
        %875 = vmatpush2.msra.mxu0 0.0
        %876 = vmatprep.subr.mxu0 0.0
        %877 = vmatpush2.msra.mxu0 0.0
        %878 = vmatprep.subr.mxu0 0.0
        %879 = vmatpush2.msra.mxu0 0.0
        %880 = vmatprep.subr.mxu0 0.0
        %881 = vmatpush2.msra.mxu0 0.0
        %882 = vmatprep.subr.mxu0 0.0
        %883 = vmatpush2.msra.mxu0 0.0
        %884 = vmatprep.subr.mxu0 0.0
        %885 = vmatpush2.msra.mxu0 0.0
        %886 = vmatprep.subr.mxu0 0.0
        %887 = vmatpush2.msra.mxu0 0.0
        %888 = vmatprep.subr.mxu0 0.0
        %889 = vmatpush2.msra.mxu0 0.0
        %890 = vmatprep.subr.mxu0 0.0
        %891 = vmatpush2.msra.mxu0 0.0
        %892 = vmatprep.subr.mxu0 0.0
        %893 = vmatpush2.msra.mxu0 0.0
        %894 = vmatprep.subr.mxu0 0.0
        %895 = vmatpush2.msra.mxu0 0.0
        %896 = vmatprep.subr.mxu0 0.0
        %897 = vmatpush2.msra.mxu0 0.0
        %898 = vmatprep.subr.mxu0 0.0
        %899 = vmatpush2.msra.mxu0 0.0
        %900 = vmatprep.subr.mxu0 0.0
        %901 = vmatpush2.msra.mxu0 0.0
        %902 = vmatprep.mubr.f32.mxu0 0.0
        %903 = vmatmul.mubr.f32.gmra.mxu0 %v783
        %v904 = vpop.f32.mrf.mxu0
        %v905 = vadd.f32 %v836, %v904
        %v906 = vpop.f32.mrf.mxu0
        %907 = vmatprep.mubr.f32.mxu0 0.0
        %908 = vmatmul.mubr.f32.gmra.mxu0 %v784
        %v909 = vpop.f32.mrf.mxu0
        %v910 = vadd.f32 %v836, %v909
        %v911 = vpop.f32.mrf.mxu0
        %912 = vmatprep.mubr.f32.mxu0 0.0
        %913 = vmatmul.mubr.f32.gmra.mxu0 %v785
        %v914 = vpop.f32.mrf.mxu0
        %v915 = vadd.f32 %v836, %v914
        %v916 = vpop.f32.mrf.mxu0
        %917 = vmatprep.mubr.f32.mxu0 0.0
        %918 = vmatmul.mubr.f32.gmra.mxu0 %v786
        %v919 = vpop.f32.mrf.mxu0
        %v920 = vadd.f32 %v836, %v919
        %v921 = vpop.f32.mrf.mxu0
        %922 = vmatprep.mubr.f32.mxu0 0.0
        %923 = vmatmul.mubr.f32.gmra.mxu0 %v787
        %v924 = vpop.f32.mrf.mxu0
        %v925 = vadd.f32 %v836, %v924
        %v926 = vpop.f32.mrf.mxu0
        %927 = vmatprep.mubr.f32.mxu0 0.0
        %928 = vmatmul.mubr.f32.gmra.mxu0 %v788
        %v929 = vpop.f32.mrf.mxu0
        %v930 = vadd.f32 %v836, %v929
        %v931 = vpop.f32.mrf.mxu0
        %932 = vmatprep.mubr.f32.mxu0 0.0
        %933 = vmatmul.mubr.f32.gmra.mxu0 %v789
        %v934 = vpop.f32.mrf.mxu0
        %v935 = vadd.f32 %v836, %v934
        %v936 = vpop.f32.mrf.mxu0
        %937 = vmatprep.mubr.f32.mxu0 0.0
        %938 = vmatmul.mubr.f32.gmra.mxu0 %v790
        %v939 = vpop.f32.mrf.mxu0
        %v940 = vadd.f32 %v836, %v939
        %v941 = vpop.f32.mrf.mxu0
        %942 = vmatprep.mubr.f32.mxu0 0.0
        %943 = vmatmul.mubr.f32.gmra.mxu0 %v791
        %v944 = vpop.f32.mrf.mxu0
        %v945 = vadd.f32 %v836, %v944
        %v946 = vpop.f32.mrf.mxu0
        %947 = vmatprep.mubr.f32.mxu0 0.0
        %948 = vmatmul.mubr.f32.gmra.mxu0 %v792
        %v949 = vpop.f32.mrf.mxu0
        %v950 = vadd.f32 %v836, %v949
        %v951 = vpop.f32.mrf.mxu0
        %952 = vmatprep.mubr.f32.mxu0 0.0
        %953 = vmatmul.mubr.f32.gmra.mxu0 %v793
        %v954 = vpop.f32.mrf.mxu0
        %v955 = vadd.f32 %v836, %v954
        %v956 = vpop.f32.mrf.mxu0
        %957 = vmatprep.mubr.f32.mxu0 0.0
        %958 = vmatmul.mubr.f32.gmra.mxu0 %v794
        %v959 = vpop.f32.mrf.mxu0
        %v960 = vadd.f32 %v836, %v959
        %v961 = vpop.f32.mrf.mxu0
        %962 = vmatprep.mubr.f32.mxu0 0.0
        %963 = vmatmul.mubr.f32.gmra.mxu0 %v795
        %v964 = vpop.f32.mrf.mxu0
        %v965 = vadd.f32 %v836, %v964
        %v966 = vpop.f32.mrf.mxu0
        %967 = vmatprep.mubr.f32.mxu0 0.0
        %968 = vmatmul.mubr.f32.gmra.mxu0 %v796
        %v969 = vpop.f32.mrf.mxu0
        %v970 = vadd.f32 %v836, %v969
        %v971 = vpop.f32.mrf.mxu0
        %972 = vmatprep.mubr.f32.mxu0 0.0
        %973 = vmatmul.mubr.f32.gmra.mxu0 %v797
        %v974 = vpop.f32.mrf.mxu0
        %v975 = vadd.f32 %v836, %v974
        %v976 = vpop.f32.mrf.mxu0
        %977 = vmatprep.mubr.f32.mxu0 0.0
        %978 = vmatmul.mubr.f32.gmra.mxu0 %v798
        %v979 = vpop.f32.mrf.mxu0
        %v980 = vadd.f32 %v836, %v979
        %v981 = vpop.f32.mrf.mxu0
        %982 = vmatprep.mubr.f32.mxu0 0.0
        %983 = vmatmul.mubr.f32.gmra.mxu0 %v799
        %v984 = vpop.f32.mrf.mxu0
        %v985 = vadd.f32 %v836, %v984
        %v986 = vpop.f32.mrf.mxu0
        %987 = vmatprep.mubr.f32.mxu0 0.0
        %988 = vmatmul.mubr.f32.gmra.mxu0 %v800
        %v989 = vpop.f32.mrf.mxu0
        %v990 = vadd.f32 %v836, %v989
        %v991 = vpop.f32.mrf.mxu0
        %992 = vmatprep.mubr.f32.mxu0 0.0
        %993 = vmatmul.mubr.f32.gmra.mxu0 %v801
        %v994 = vpop.f32.mrf.mxu0
        %v995 = vadd.f32 %v836, %v994
        %v996 = vpop.f32.mrf.mxu0
        %997 = vmatprep.mubr.f32.mxu0 0.0
        %998 = vmatmul.mubr.f32.gmra.mxu0 %v802
        %v999 = vpop.f32.mrf.mxu0
        %v1000 = vadd.f32 %v836, %v999
        %v1001 = vpop.f32.mrf.mxu0
        %1002 = vmatprep.mubr.f32.mxu0 0.0
        %1003 = vmatmul.mubr.f32.gmra.mxu0 %v803
        %v1004 = vpop.f32.mrf.mxu0
        %v1005 = vadd.f32 %v836, %v1004
        %v1006 = vpop.f32.mrf.mxu0
        %1007 = vmatprep.mubr.f32.mxu0 0.0
        %1008 = vmatmul.mubr.f32.gmra.mxu0 %v804
        %v1009 = vpop.f32.mrf.mxu0
        %v1010 = vadd.f32 %v836, %v1009
        %v1011 = vpop.f32.mrf.mxu0
        %1012 = vmatprep.mubr.f32.mxu0 0.0
        %1013 = vmatmul.mubr.f32.gmra.mxu0 %v805
        %v1014 = vpop.f32.mrf.mxu0
        %v1015 = vadd.f32 %v836, %v1014
        %v1016 = vpop.f32.mrf.mxu0
        %1017 = vmatprep.mubr.f32.mxu0 0.0
        %1018 = vmatmul.mubr.f32.gmra.mxu0 %v806
        %v1019 = vpop.f32.mrf.mxu0
        %v1020 = vadd.f32 %v836, %v1019
        %v1021 = vpop.f32.mrf.mxu0
        %1022 = vmatprep.mubr.f32.mxu0 0.0
        %1023 = vmatmul.mubr.f32.gmra.mxu0 %v807
        %v1024 = vpop.f32.mrf.mxu0
        %v1025 = vadd.f32 %v836, %v1024
        %v1026 = vpop.f32.mrf.mxu0
        %1027 = vmatprep.mubr.f32.mxu0 0.0
        %1028 = vmatmul.mubr.f32.gmra.mxu0 %v808
        %v1029 = vpop.f32.mrf.mxu0
        %v1030 = vadd.f32 %v836, %v1029
        %v1031 = vpop.f32.mrf.mxu0
        %1032 = vmatprep.mubr.f32.mxu0 0.0
        %1033 = vmatmul.mubr.f32.gmra.mxu0 %v809
        %v1034 = vpop.f32.mrf.mxu0
        %v1035 = vadd.f32 %v836, %v1034
        %v1036 = vpop.f32.mrf.mxu0
        %1037 = vmatprep.mubr.f32.mxu0 0.0
        %1038 = vmatmul.mubr.f32.gmra.mxu0 %v810
        %v1039 = vpop.f32.mrf.mxu0
        %v1040 = vadd.f32 %v836, %v1039
        %v1041 = vpop.f32.mrf.mxu0
        %1042 = vmatprep.mubr.f32.mxu0 0.0
        %1043 = vmatmul.mubr.f32.gmra.mxu0 %v811
        %v1044 = vpop.f32.mrf.mxu0
        %v1045 = vadd.f32 %v836, %v1044
        %v1046 = vpop.f32.mrf.mxu0
        %1047 = vmatprep.mubr.f32.mxu0 0.0
        %1048 = vmatmul.mubr.f32.gmra.mxu0 %v812
        %v1049 = vpop.f32.mrf.mxu0
        %v1050 = vadd.f32 %v836, %v1049
        %v1051 = vpop.f32.mrf.mxu0
        %1052 = vmatprep.mubr.f32.mxu0 0.0
        %1053 = vmatmul.mubr.f32.gmra.mxu0 %v813
        %v1054 = vpop.f32.mrf.mxu0
        %v1055 = vadd.f32 %v836, %v1054
        %v1056 = vpop.f32.mrf.mxu0
        %1057 = vmatprep.mubr.f32.mxu0 0.0
        %1058 = vmatmul.mubr.f32.gmra.mxu0 %v814
        %v1059 = vpop.f32.mrf.mxu0
        %v1060 = vadd.f32 %v836, %v1059
        %v1061 = vpop.f32.mrf.mxu0
        %1062 = vdwg.mxu0
        %v1063 = vadd.f32 %v206, %v905
        %v1064 = vadd.f32 %v207, %v910
        %v1065 = vadd.f32 %v208, %v915
        %v1066 = vadd.f32 %v209, %v920
        %v1067 = vadd.f32 %v210, %v925
        %v1068 = vadd.f32 %v211, %v930
        %v1069 = vadd.f32 %v212, %v935
        %v1070 = vadd.f32 %v213, %v940
        %v1071 = vadd.f32 %v214, %v945
        %v1072 = vadd.f32 %v215, %v950
        %v1073 = vadd.f32 %v216, %v955
        %v1074 = vadd.f32 %v217, %v960
        %v1075 = vadd.f32 %v218, %v965
        %v1076 = vadd.f32 %v219, %v970
        %v1077 = vadd.f32 %v220, %v975
        %v1078 = vadd.f32 %v221, %v980
        %v1079 = vadd.f32 %v222, %v985
        %v1080 = vadd.f32 %v223, %v990
        %v1081 = vadd.f32 %v224, %v995
        %v1082 = vadd.f32 %v225, %v1000
        %v1083 = vadd.f32 %v226, %v1005
        %v1084 = vadd.f32 %v227, %v1010
        %v1085 = vadd.f32 %v228, %v1015
        %v1086 = vadd.f32 %v229, %v1020
        %v1087 = vadd.f32 %v230, %v1025
        %v1088 = vadd.f32 %v231, %v1030
        %v1089 = vadd.f32 %v232, %v1035
        %v1090 = vadd.f32 %v233, %v1040
        %v1091 = vadd.f32 %v234, %v1045
        %v1092 = vadd.f32 %v235, %v1050
        %v1093 = vadd.f32 %v236, %v1055
        %v1094 = vadd.f32 %v237, %v1060
        %1095 = vst [vmem:[%s203] sm:$0xff] %v1063
        %1096 = vst [vmem:[%s203 + $0x8] sm:$0xff] %v1064
        %1097 = vst [vmem:[%s203 + $0x10] sm:$0xff] %v1065
        %1098 = vst [vmem:[%s203 + $0x18] sm:$0xff] %v1066
        %1099 = vst [vmem:[%s203 + $0x20] sm:$0xff] %v1067
        %1100 = vst [vmem:[%s203 + $0x28] sm:$0xff] %v1068
        %1101 = vst [vmem:[%s203 + $0x30] sm:$0xff] %v1069
        %1102 = vst [vmem:[%s203 + $0x38] sm:$0xff] %v1070
        %1103 = vst [vmem:[%s203 + $0x40] sm:$0xff] %v1071
        %1104 = vst [vmem:[%s203 + $0x48] sm:$0xff] %v1072
        %1105 = vst [vmem:[%s203 + $0x50] sm:$0xff] %v1073
        %1106 = vst [vmem:[%s203 + $0x58] sm:$0xff] %v1074
        %1107 = vst [vmem:[%s203 + $0x60] sm:$0xff] %v1075
        %1108 = vst [vmem:[%s203 + $0x68] sm:$0xff] %v1076
        %1109 = vst [vmem:[%s203 + $0x70] sm:$0xff] %v1077
        %1110 = vst [vmem:[%s203 + $0x78] sm:$0xff] %v1078
        %1111 = vst [vmem:[%s203 + $0x80] sm:$0xff] %v1079
        %1112 = vst [vmem:[%s203 + $0x88] sm:$0xff] %v1080
        %1113 = vst [vmem:[%s203 + $0x90] sm:$0xff] %v1081
        %1114 = vst [vmem:[%s203 + $0x98] sm:$0xff] %v1082
        %1115 = vst [vmem:[%s203 + $0xa0] sm:$0xff] %v1083
        %1116 = vst [vmem:[%s203 + $0xa8] sm:$0xff] %v1084
        %1117 = vst [vmem:[%s203 + $0xb0] sm:$0xff] %v1085
        %1118 = vst [vmem:[%s203 + $0xb8] sm:$0xff] %v1086
        %1119 = vst [vmem:[%s203 + $0xc0] sm:$0xff] %v1087
        %1120 = vst [vmem:[%s203 + $0xc8] sm:$0xff] %v1088
        %1121 = vst [vmem:[%s203 + $0xd0] sm:$0xff] %v1089
        %1122 = vst [vmem:[%s203 + $0xd8] sm:$0xff] %v1090
        %1123 = vst [vmem:[%s203 + $0xe0] sm:$0xff] %v1091
        %1124 = vst [vmem:[%s203 + $0xe8] sm:$0xff] %v1092
        %1125 = vst [vmem:[%s203 + $0xf0] sm:$0xff] %v1093
        %1126 = vst [vmem:[%s203 + $0xf8] sm:$0xff] %v1094
        %s1127 = sand.u32 %s97, 1
        %s1128 = scalar_lea.sflag [#allocation4], %s1127
        %s1129 = sand.u32 %s97, 1
        %s1130 = smul.addr %s1129, 256
        %s1131 = scalar_lea.vmem [#allocation7], %s1130
        // Predicated region
        $region41: #{tpu_custom_call.1} parent=31 // pred_check
          %p1132 = pneg %p107
        $region42: #{tpu_custom_call.1} parent=31 // pred_check_branch
          %1134 = sbr.rel (%p1132) target = $region44
        $region43: #{tpu_custom_call.1} parent=31 // pred_region
          %s1135 = smul.u32 32, %s21
          %s1137 = ssub.s32 4096, 4096
          %1138 = vsyncadd %s1128, %s1137
          %s1139 = smul.addr %s1135, 128
          %s1140 = scalar_lea.hbm %s3, %s1139
          %s1141 = sshll.u32 %s1131, 4
          %s1142 = int_to_ptr.vmem [resolvable:$true] %s1141
          %1147 = dma.vmem_to_hbm [thread:$0]  %s1142, 4096, %s1140, %s1128, 128, 128, 8
        $region44: #{tpu_custom_call.1} parent=31 // pred_fallthru
          _
      $region32: #{tpu_custom_call.1} parent=5 // pred_fallthru
        _
      %p1148 = scmp.le.s32.totalorder 2, %s16
      // Predicated region
      $region45: #{tpu_custom_call.1} parent=5 // pred_check
        %p1149 = pneg %p1148
      $region46: #{tpu_custom_call.1} parent=5 // pred_check_branch
        %1151 = sbr.rel (%p1149) target = $region48
      $region47: #{tpu_custom_call.1} parent=5 // pred_region
        %s1152 = ssub.s32 %s16, 2
        // Predicated region
        $region49: #{tpu_custom_call.1} parent=47 // pred_check
          %p1153 = pneg %p113
        $region50: #{tpu_custom_call.1} parent=47 // pred_check_branch
          %1155 = sbr.rel (%p1153) target = $region52
        $region51: #{tpu_custom_call.1} parent=47 // pred_region
          %s1156 = sand.u32 %s98, 1
          %s1157 = scalar_lea.sflag [#allocation4], %s1156
          %s1158 = sand.u32 %s98, 1
          %s1159 = smul.addr %s1158, 256
          %s1160 = scalar_lea.vmem [#allocation7], %s1159
          %1161 = dma.done %s1157, 4096
        $region52: #{tpu_custom_call.1} parent=47 // pred_fallthru
          _
      $region48: #{tpu_custom_call.1} parent=5 // pred_fallthru
        _
    $region6: #{tpu_custom_call.1} parent=1 // loop_footer
      %s20 = sadd.s32 1, %s16
    $region7: #{tpu_custom_call.1} parent=1 // loop_footer_branch
      %15 = sbr.rel target = $region3
    $region8: #{tpu_custom_call.1} parent=1 // loop_exit
      _
    %1162 = vsyncpa [#allocation3], 1
    %s1163 = scalar_lea.sflag [#allocation3], 1
    %1164 = vsyncpa %s1163, 1
    %1165 = vsyncpa [#allocation6], 1
    %1166 = vsyncpa [#allocation4], 1
    %s1167 = scalar_lea.sflag [#allocation4], 1
    %1168 = vsyncpa %s1167, 1

</llo_original>
